<compile_context>
chip_gen: v7x
topology: tpu7x:2x2x1
jax: 0.10.0
libtpu: 0.0.40
codegen_flags: <defaults>
</compile_context>

<pallas_src>
import jax
import jax.numpy as jnp
from jax.experimental import pallas as pl
from jax.experimental.pallas import tpu as pltpu


def _round_up(a, m):
    return ((a + m - 1) // m) * m


def _round_down(a, m):
    return (a // m) * m


def _tile_budget():
    """Per-generation (target_tile_bytes, vmem_limit_bytes) for the x/out blocks."""
    cap = None
    try:
        info = pltpu.get_tpu_info()
        cap = int(getattr(info, "vmem_capacity_bytes", 0)) or None
    except Exception:
        cap = None
    if cap is not None and cap <= (80 << 20):
        # v7x-class: 64 MiB physical VMEM per TensorCore.
        # 4 MiB tiles -> 2 refs x 2 bufs x 4 MiB = 16 MiB resident, well under cap.
        return 4 << 20, 44 << 20
    if cap is not None:
        # v5e / v6e: 128 MiB physical VMEM (scoped defaults 16 / 32 MiB).
        # 8 MiB tiles -> 32 MiB resident; raise the scoped limit explicitly.
        return 8 << 20, 64 << 20
    # Unknown backend: conservative config that fits every generation.
    return 4 << 20, 40 << 20


def _scaling_kernel(scale_ref, center_ref, x_ref, o_ref):
    # scale_ref / center_ref : (TM, 1) f32 per-row parameter columns.
    # x_ref / o_ref          : (TM, TN) tile (rows -> sublanes, L -> lanes).
    s = scale_ref[...]
    c = center_ref[...]
    o_ref[...] = (s * x_ref[...] - c).astype(o_ref.dtype)


def trainable_scaling(x, scale, center):
    """out[b, c, l] = scale[c] * x[b, c, l] - center[c].

    x: (B, C, L); scale, center: arrays holding C elements (e.g. (1, C)).
    """
    B, C, L = x.shape
    R = B * C
    x2 = x.reshape(R, L)                      # free: contiguous row-major view

    itemsize = jnp.dtype(x.dtype).itemsize
    sublane = max(8, 32 // max(1, itemsize))  # 8 f32 / 16 bf16 / 32 int8 packing
    tile_bytes, vmem_limit = _tile_budget()

    # --- tile selection: (sublane,128)-aligned, balanced, no wrapper padding ---
    # Pass 1: nominal row-stripe height, then the widest lane-dense width the
    #         byte budget allows, balanced over L so the last tile is not tiny.
    TM0 = min(32 * sublane, _round_up(R, sublane))
    tn_target = max(128, _round_down(tile_bytes // (TM0 * itemsize), 128))
    nL = pl.cdiv(L, tn_target)
    TN = _round_up(pl.cdiv(L, nL), 128)
    # Pass 2: give leftover byte budget back to the row axis (helps short-L inputs).
    tm_target = max(TM0, _round_down(tile_bytes // (TN * itemsize), sublane))
    nR = pl.cdiv(R, tm_target)
    TM = _round_up(pl.cdiv(R, nR), sublane)

    grid = (pl.cdiv(R, TM), pl.cdiv(L, TN))

    # Tiny per-row parameter columns (flattened row r -> channel r % C), padded
    # to whole row blocks so their (TM, 1) DMAs are never clipped (~R*4 bytes;
    # padded rows never reach the output since x/out edge tiles are masked).
    Rp = grid[0] * TM
    scale_rows = jnp.tile(scale.reshape(-1).astype(jnp.float32), B)
    center_rows = jnp.tile(center.reshape(-1).astype(jnp.float32), B)
    scale_col = jnp.pad(scale_rows, (0, Rp - R), constant_values=1.0).reshape(Rp, 1)
    center_col = jnp.pad(center_rows, (0, Rp - R)).reshape(Rp, 1)

    out2 = pl.pallas_call(
        _scaling_kernel,
        out_shape=jax.ShapeDtypeStruct((R, L), x.dtype),
        grid_spec=pltpu.PrefetchScalarGridSpec(
            num_scalar_prefetch=0,
            grid=grid,
            in_specs=[
                # Block index constant along the inner (L) axis -> the (TM, 1)
                # columns are only re-DMA'd when the row stripe changes.
                pl.BlockSpec((TM, 1), lambda i, j: (i, 0)),
                pl.BlockSpec((TM, 1), lambda i, j: (i, 0)),
                pl.BlockSpec((TM, TN), lambda i, j: (i, j)),
            ],
            out_specs=pl.BlockSpec((TM, TN), lambda i, j: (i, j)),
        ),
        compiler_params=pltpu.CompilerParams(
            dimension_semantics=("parallel", "parallel"),
            vmem_limit_bytes=vmem_limit,
        ),
    )(scale_col, center_col, x2)

    return out2.reshape(B, C, L)


if __name__ == "__main__":
    # Small shapes consistent with the module: batch=2, channels=4, seq_len=128.
    B, C, L = 2, 4, 128

    key = jax.random.PRNGKey(0)
    kx, ks, kc = jax.random.split(key, 3)

    x = jax.random.normal(kx, (B, C, L), dtype=jnp.float32)
    # Module parameter shapes are (1, C) each.
    scale = 1.0 + 0.1 * jax.random.normal(ks, (1, C), dtype=jnp.float32)
    center = 0.1 * jax.random.normal(kc, (1, C), dtype=jnp.float32)

    out = trainable_scaling(x, scale, center)
    out = jax.block_until_ready(out)

    # Reference check against plain-JAX computation of the PyTorch semantics.
    ref = scale.reshape(-1)[None, :, None] * x - center.reshape(-1)[None, :, None]
    assert out.shape == (B, C, L)
    assert jnp.allclose(out, ref, atol=1e-6, rtol=1e-6)

    print("KERNEL_OK")
</pallas_src>

<mosaic_0001>
module attributes {stable_mosaic.version = 11 : i64} {
  func.func @_scaling_kernel(%arg0: i32, %arg1: i32, %arg2: memref<8x1xf32, #tpu.memory_space<vmem>>, %arg3: memref<8x1xf32, #tpu.memory_space<vmem>>, %arg4: memref<8x128xf32, #tpu.memory_space<vmem>>, %arg5: memref<8x128xf32, #tpu.memory_space<vmem>>) attributes {dimension_semantics = [#tpu.dimension_semantics<parallel>, #tpu.dimension_semantics<parallel>], iteration_bounds = array<i64: 1, 1>, scalar_prefetch = 0 : i64, scratch_operands = 0 : i64, tpu.core_type = #tpu.core_type<tc>, window_params = [{transform_indices = @transform_0, window_bounds = array<i64: 8, 1>}, {transform_indices = @transform_1, window_bounds = array<i64: 8, 1>}, {transform_indices = @transform_2, window_bounds = array<i64: 8, 128>}, {transform_indices = @transform_3, window_bounds = array<i64: 8, 128>}]} {
    %c0 = arith.constant 0 : index
    %c0_0 = arith.constant 0 : index
    %0 = vector.load %arg2[%c0, %c0_0] : memref<8x1xf32, #tpu.memory_space<vmem>>, vector<8x1xf32>
    %c0_1 = arith.constant 0 : index
    %c0_2 = arith.constant 0 : index
    %1 = vector.load %arg3[%c0_1, %c0_2] : memref<8x1xf32, #tpu.memory_space<vmem>>, vector<8x1xf32>
    %c0_3 = arith.constant 0 : index
    %c0_4 = arith.constant 0 : index
    %2 = vector.load %arg4[%c0_3, %c0_4] : memref<8x128xf32, #tpu.memory_space<vmem>>, vector<8x128xf32>
    %3 = vector.broadcast %0 : vector<8x1xf32> to vector<8x128xf32>
    %4 = arith.mulf %3, %2 : vector<8x128xf32>
    %5 = vector.broadcast %1 : vector<8x1xf32> to vector<8x128xf32>
    %6 = arith.subf %4, %5 : vector<8x128xf32>
    %c0_5 = arith.constant 0 : index
    %c0_6 = arith.constant 0 : index
    %7 = vector.load %arg5[%c0_5, %c0_6] : memref<8x128xf32, #tpu.memory_space<vmem>>, vector<8x128xf32>
    tpu.vector_store %arg5[%c0_5, %c0_6], %6 {strides = array<i32>} : memref<8x128xf32, #tpu.memory_space<vmem>>, vector<8x128xf32>,
    return
  }
  func.func @transform_0(%arg0: i32, %arg1: i32) -> (i32, i32) {
    %c0_i32 = arith.constant 0 : i32
    %c0_i32_0 = arith.constant 0 : i32
    return %arg0, %c0_i32 : i32, i32
  }
  func.func @transform_1(%arg0: i32, %arg1: i32) -> (i32, i32) {
    %c0_i32 = arith.constant 0 : i32
    %c0_i32_0 = arith.constant 0 : i32
    return %arg0, %c0_i32 : i32, i32
  }
  func.func @transform_2(%arg0: i32, %arg1: i32) -> (i32, i32) {
    %c0_i32 = arith.constant 0 : i32
    return %arg0, %arg1 : i32, i32
  }
  func.func @transform_3(%arg0: i32, %arg1: i32) -> (i32, i32) {
    %c0_i32 = arith.constant 0 : i32
    return %arg0, %arg1 : i32, i32
  }
}

</mosaic_0001>

<llo_original>
// kernel: tpu_custom_call.1
$region0: #{tpu_custom_call.1}
  #allocation0 [shape = 'u32[]', space=smem, size = 0x4, offset = 0x4, fixed_abs, tag = 'smem constant byte address 0x4 - core index']
  #allocation1 [shape = 'u32[144,128]{1,0:T(1,128)}', space=vmem, size = 0x12000, scoped, tag = 'internal scratch']
  %s0 = inlined_call_operand.vmem [shape: f32[8,1], index: 0, kind: input, shape index: {}]
  %s1 = inlined_call_operand.vmem [shape: f32[8,1], index: 1, kind: input, shape index: {}]
  %s2 = inlined_call_operand.vmem [shape: f32[8,128], index: 2, kind: input, shape index: {}]
  %s3 = inlined_call_operand.hbm [shape: f32[8,128], index: 3, kind: output, shape index: {}]
  %s4 = sld [smem:[#allocation0]]
  $region22: #{tpu_custom_call.1} parent=0
    _
  %s6 = ssub.s32 1, %s4
  %s7 = scalar_select 0, %s6, %s4
  $region1: #{tpu_custom_call.1} parent=0
    #allocation2 [shape = 'u8[4096]{0}', space=vmem, size = 0x1000, scoped, tag = 'output window, operand 0, single buffered']
    #allocation3 [shape = 's32[1]{0}', space=sflag, size = 0x4, scoped, tag = 'scoped memory for tpu_custom_call.1']
    %8 = vsyncpa [#allocation3], 0
    // Predicated region
    $region2: #{tpu_custom_call.1} parent=1 // pred_check
      _
    $region3: #{tpu_custom_call.1} parent=1 // pred_check_branch
      %10 = sbr.rel (0) target = $region5
    $region4: #{tpu_custom_call.1} parent=1 // pred_region
      _
    $region5: #{tpu_custom_call.1} parent=1 // pred_fallthru
      _
    // Predicated region
    $region6: #{tpu_custom_call.1} parent=1 // pred_check
      _
    $region7: #{tpu_custom_call.1} parent=1 // pred_check_branch
      %12 = sbr.rel (0) target = $region9
    $region8: #{tpu_custom_call.1} parent=1 // pred_region
      _
    $region9: #{tpu_custom_call.1} parent=1 // pred_fallthru
      _
    // Predicated region
    $region10: #{tpu_custom_call.1} parent=1 // pred_check
      _
    $region11: #{tpu_custom_call.1} parent=1 // pred_check_branch
      %14 = sbr.rel (0) target = $region13
    $region12: #{tpu_custom_call.1} parent=1 // pred_region
      _
    $region13: #{tpu_custom_call.1} parent=1 // pred_fallthru
      _
    %v15 = vld [vmem:[%s0] sm:$0xff]
    %v16 = vld [vmem:[%s1] sm:$0xff]
    %v17 = vld [vmem:[%s2] sm:$0xff]
    %19 = vset.pattern.permute.xlu0 0
    %20 = vperm.xlu0 %19, %v15
    %v21 = vpop.permute.xlu0 %20
    %v23 = vmul.f32 %v21, %v17
    %25 = vset.pattern.permute.xlu0 0
    %26 = vperm.xlu0 %25, %v16
    %v27 = vpop.permute.xlu0 %26
    %v29 = vsub.f32 %v23, %v27
    %30 = vst [vmem:[#allocation2] sm:$0xff] %v29
    // Predicated region
    $region14: #{tpu_custom_call.1} parent=1 // pred_check
      _
    $region15: #{tpu_custom_call.1} parent=1 // pred_check_branch
      %32 = sbr.rel (0) target = $region17
    $region16: #{tpu_custom_call.1} parent=1 // pred_region
      %s34 = ssub.s32 128, 128
      %35 = vsyncadd [#allocation3], %s34
      %s37 = sshll.u32 [#allocation2], 4
      %s38 = int_to_ptr.vmem [resolvable:$true] %s37
      %40 = dma.vmem_to_hbm [thread:$0]  %s38, 128, %s3, [#allocation3]
    $region17: #{tpu_custom_call.1} parent=1 // pred_fallthru
      _
    // Predicated region
    $region18: #{tpu_custom_call.1} parent=1 // pred_check
      _
    $region19: #{tpu_custom_call.1} parent=1 // pred_check_branch
      %42 = sbr.rel (0) target = $region21
    $region20: #{tpu_custom_call.1} parent=1 // pred_region
      %43 = dma.done [#allocation3], 128
    $region21: #{tpu_custom_call.1} parent=1 // pred_fallthru
      _
    %44 = vsyncpa [#allocation3], 1

</llo_original>
